<compile_context>
chip_gen: v5e
topology: v5e:2x2
jax: 0.10.0
libtpu: 0.0.40
codegen_flags: <defaults>
</compile_context>

<pallas_src>
import numpy as np
import jax
import jax.numpy as jnp
from jax.experimental import pallas as pl
from jax.experimental.pallas import tpu as pltpu


_TARGET_TILE_BYTES = 2 << 20   # ~2 MiB output tile


def _round_up(n, m):
    return ((n + m - 1) // m) * m


# ---------------------------------------------------------------------------
# Kernels (pure VPU broadcasts)
# ---------------------------------------------------------------------------

def _poly2_kernel_nd(t_ref, x0_ref, x1_ref, w_ref, out_ref):
    """Lane-dense (N, D) layout: t is a (TN, 1) column, params are (1, TD) rows."""
    t = t_ref[...]                    # (TN, 1)
    x0 = x0_ref[...]                  # (1, TD)
    dx = x1_ref[...] - x0             # (1, TD) -- (1,TD)-scale, negligible
    w = w_ref[...]                    # (1, TD)
    out_ref[...] = x0 + t * dx + (t - t * t) * w     # (TN, TD)


def _poly2_kernel_dn(t_ref, x0_ref, x1_ref, w_ref, out_ref):
    """Transposed (D, N) layout for small D: t is a (1, TNL) row, params (D, 1) cols."""
    t = t_ref[...]                    # (1, TNL)
    x0 = x0_ref[...]                  # (D, 1)
    dx = x1_ref[...] - x0             # (D, 1)
    w = w_ref[...]                    # (D, 1)
    out_ref[...] = x0 + t * dx + (t - t * t) * w     # (D, TNL)


# ---------------------------------------------------------------------------
# Tile selection (generation-aware VMEM budget, >= 2 grid steps for v7x)
# ---------------------------------------------------------------------------

def _tiles_nd(N, D):
    """(TN, TD) for the lane-dense (N, D) path."""
    TD = D if D <= 2048 else 2048                 # 128-multiple feature tile for huge D
    if N < 8:
        TN = N                                    # full batch extent (= array dim, legal)
    else:
        TN = max(8, (_TARGET_TILE_BYTES // (TD * 4)) // 8 * 8)
        half = _round_up(-(-N // 2), 8)           # keep >= 2 grid steps (v7x megacore)
        TN = max(8, min(TN, half, (N // 8) * 8))
    return TN, TD


def _tiles_dn(N, D):
    """TNL (lane tile over N) for the transposed (D, N) path."""
    if N <= 128:
        return N                                  # single full-extent block
    TNL = max(128, (_TARGET_TILE_BYTES // (D * 4)) // 128 * 128)
    half = _round_up(-(-N // 2), 128)             # keep >= 2 grid steps (v7x megacore)
    return max(128, min(TNL, half, (N // 128) * 128))


# ---------------------------------------------------------------------------
# pallas_call wrappers
# ---------------------------------------------------------------------------

def _poly2_nd(t, x0, x1, w, N, D):
    TN, TD = _tiles_nd(N, D)
    grid = (pl.cdiv(N, TN), pl.cdiv(D, TD))
    out = pl.pallas_call(
        _poly2_kernel_nd,
        out_shape=jax.ShapeDtypeStruct((N, D), jnp.float32),
        grid_spec=pltpu.PrefetchScalarGridSpec(
            num_scalar_prefetch=0,
            grid=grid,
            in_specs=[
                pl.BlockSpec((TN, 1), lambda i, j: (i, 0)),   # t column (pipelined)
                pl.BlockSpec((1, TD), lambda i, j: (0, j)),   # x0
                pl.BlockSpec((1, TD), lambda i, j: (0, j)),   # x1
                pl.BlockSpec((1, TD), lambda i, j: (0, j)),   # w
            ],
            out_specs=pl.BlockSpec((TN, TD), lambda i, j: (i, j)),
        ),
        compiler_params=pltpu.CompilerParams(
            dimension_semantics=("parallel", "parallel")),
        cost_estimate=pl.CostEstimate(
            flops=4 * N * D, transcendentals=0,
            bytes_accessed=4 * (N + 3 * D + N * D)),
    )(t.reshape(N, 1), x0.reshape(1, D), x1.reshape(1, D), w.reshape(1, D))
    return out


def _poly2_dn(t, x0, x1, w, N, D):
    TNL = _tiles_dn(N, D)
    grid = (pl.cdiv(N, TNL),)
    out_t = pl.pallas_call(
        _poly2_kernel_dn,
        out_shape=jax.ShapeDtypeStruct((D, N), jnp.float32),
        grid_spec=pltpu.PrefetchScalarGridSpec(
            num_scalar_prefetch=0,
            grid=grid,
            in_specs=[
                pl.BlockSpec((1, TNL), lambda i: (0, i)),     # t row (pipelined)
                pl.BlockSpec((D, 1), lambda i: (0, 0)),       # x0 (VMEM-resident)
                pl.BlockSpec((D, 1), lambda i: (0, 0)),       # x1 (VMEM-resident)
                pl.BlockSpec((D, 1), lambda i: (0, 0)),       # w  (VMEM-resident)
            ],
            out_specs=pl.BlockSpec((D, TNL), lambda i: (0, i)),
        ),
        compiler_params=pltpu.CompilerParams(
            dimension_semantics=("parallel",)),
        cost_estimate=pl.CostEstimate(
            flops=4 * N * D, transcendentals=0,
            bytes_accessed=4 * (N + 3 * D + N * D)),
    )(t.reshape(1, N), x0.reshape(D, 1), x1.reshape(D, 1), w.reshape(D, 1))
    # Wrapper-side layout plumbing back to the torch (N, D) convention.
    return out_t.T


@jax.jit
def poly2_forward(t, x0, x1, w):
    """Poly2.forward. t: (N,) or (N,1); x0/x1/w: (D,) or (1,D). Returns (N, D) f32."""
    t = t.reshape(-1).astype(jnp.float32)
    x0 = x0.reshape(-1).astype(jnp.float32)
    x1 = x1.reshape(-1).astype(jnp.float32)
    w = w.reshape(-1).astype(jnp.float32)
    N, D = t.shape[0], x0.shape[0]
    if D < 128:
        # Tiny feature dim (typical 2-D / 3-D curve): keep N on the lane axis so
        # stores stay lane-dense; transpose back outside the kernel.
        return _poly2_dn(t, x0, x1, w, N, D)
    return _poly2_nd(t, x0, x1, w, N, D)


def poly2_points(x0, x1, w, N):
    """Poly2.points(): forward on t = linspace(0, 1, N)."""
    # The t input is ~N*4 bytes vs N*D*4 output bytes; generating t in-kernel
    # (program_id*TN + iota) would only save a negligible DMA now that padding
    # is gone, so we keep the simple host-side linspace.
    t = jnp.linspace(0.0, 1.0, N, dtype=jnp.float32)
    return poly2_forward(t, x0, x1, w)


def poly2_ref(t, x0, x1, w):
    """Pure-JAX reference mirroring the torch forward (rank-1 matmuls)."""
    _t = t.reshape(-1, 1).astype(jnp.float32)
    x0 = x0.reshape(1, -1).astype(jnp.float32)
    x1 = x1.reshape(1, -1).astype(jnp.float32)
    w = w.reshape(1, -1).astype(jnp.float32)
    line = (1.0 - _t) @ x0 + _t @ x1
    poly = (_t ** 2) @ (-w) + _t @ w
    return line + poly


if __name__ == "__main__":
    key = jax.random.PRNGKey(0)
    k0, k1, kw, kt, k2, k3, kw2 = jax.random.split(key, 7)

    # Case 1: lane-dense (N, D) path; ragged N (not a multiple of 8 or the tile).
    N1, D1 = 100, 128
    x0 = jax.random.normal(k0, (D1,), jnp.float32)
    x1 = jax.random.normal(k1, (D1,), jnp.float32)
    # The module initializes w (nn.Parameter) to zeros; use nonzero w so the
    # quadratic term is actually exercised.
    w = 0.1 * jax.random.normal(kw, (D1,), jnp.float32)
    t = jax.random.uniform(kt, (N1,), jnp.float32)
    out = jax.block_until_ready(poly2_forward(t, x0, x1, w))
    ref = poly2_ref(t, x0, x1, w)
    assert out.shape == (N1, D1)
    np.testing.assert_allclose(np.asarray(out), np.asarray(ref), rtol=1e-5, atol=1e-5)

    # Case 2: typical small-D curve (D=2) via points(); transposed N-on-lanes path,
    # ragged N not a multiple of 128.
    N2, D2 = 257, 2
    x0b = jax.random.normal(k2, (D2,), jnp.float32)
    x1b = jax.random.normal(k3, (D2,), jnp.float32)
    wb = 0.1 * jax.random.normal(kw2, (D2,), jnp.float32)
    pts = jax.block_until_ready(poly2_points(x0b, x1b, wb, N2))
    t2 = jnp.linspace(0.0, 1.0, N2, dtype=jnp.float32)
    ref2 = poly2_ref(t2, x0b, x1b, wb)
    assert pts.shape == (N2, D2)
    np.testing.assert_allclose(np.asarray(pts), np.asarray(ref2), rtol=1e-5, atol=1e-5)

    # TODO(synk): Poly2.plot() is matplotlib host-side visualization; not a kernel concern.
    print("KERNEL_OK")
</pallas_src>

<mosaic_0001>
module attributes {stable_mosaic.version = 11 : i64} {
  func.func @_poly2_kernel_nd(%arg0: i32, %arg1: i32, %arg2: memref<56x1xf32, #tpu.memory_space<vmem>>, %arg3: memref<1x128xf32, #tpu.memory_space<vmem>>, %arg4: memref<1x128xf32, #tpu.memory_space<vmem>>, %arg5: memref<1x128xf32, #tpu.memory_space<vmem>>, %arg6: memref<56x128xf32, #tpu.memory_space<vmem>>) attributes {dimension_semantics = [#tpu.dimension_semantics<parallel>, #tpu.dimension_semantics<parallel>], iteration_bounds = array<i64: 2, 1>, scalar_prefetch = 0 : i64, scratch_operands = 0 : i64, tpu.core_type = #tpu.core_type<tc>, window_params = [{transform_indices = @transform_0, window_bounds = array<i64: 56, 1>}, {transform_indices = @transform_1, window_bounds = array<i64: 1, 128>}, {transform_indices = @transform_2, window_bounds = array<i64: 1, 128>}, {transform_indices = @transform_3, window_bounds = array<i64: 1, 128>}, {transform_indices = @transform_4, window_bounds = array<i64: 56, 128>}]} {
    %c0 = arith.constant 0 : index
    %c0_0 = arith.constant 0 : index
    %0 = vector.load %arg2[%c0, %c0_0] : memref<56x1xf32, #tpu.memory_space<vmem>>, vector<56x1xf32>
    %c0_1 = arith.constant 0 : index
    %c0_2 = arith.constant 0 : index
    %1 = vector.load %arg3[%c0_1, %c0_2] : memref<1x128xf32, #tpu.memory_space<vmem>>, vector<1x128xf32>
    %c0_3 = arith.constant 0 : index
    %c0_4 = arith.constant 0 : index
    %2 = vector.load %arg4[%c0_3, %c0_4] : memref<1x128xf32, #tpu.memory_space<vmem>>, vector<1x128xf32>
    %3 = arith.subf %2, %1 : vector<1x128xf32>
    %c0_5 = arith.constant 0 : index
    %c0_6 = arith.constant 0 : index
    %4 = vector.load %arg5[%c0_5, %c0_6] : memref<1x128xf32, #tpu.memory_space<vmem>>, vector<1x128xf32>
    %5 = vector.broadcast %0 : vector<56x1xf32> to vector<56x128xf32>
    %6 = vector.broadcast %3 : vector<1x128xf32> to vector<56x128xf32>
    %7 = arith.mulf %5, %6 : vector<56x128xf32>
    %8 = vector.broadcast %1 : vector<1x128xf32> to vector<56x128xf32>
    %9 = arith.addf %8, %7 : vector<56x128xf32>
    %10 = arith.mulf %0, %0 : vector<56x1xf32>
    %11 = arith.subf %0, %10 : vector<56x1xf32>
    %12 = vector.broadcast %11 : vector<56x1xf32> to vector<56x128xf32>
    %13 = vector.broadcast %4 : vector<1x128xf32> to vector<56x128xf32>
    %14 = arith.mulf %12, %13 : vector<56x128xf32>
    %15 = arith.addf %9, %14 : vector<56x128xf32>
    %c0_7 = arith.constant 0 : index
    %c0_8 = arith.constant 0 : index
    %16 = vector.load %arg6[%c0_7, %c0_8] : memref<56x128xf32, #tpu.memory_space<vmem>>, vector<56x128xf32>
    tpu.vector_store %arg6[%c0_7, %c0_8], %15 {strides = array<i32>} : memref<56x128xf32, #tpu.memory_space<vmem>>, vector<56x128xf32>,
    return
  }
  func.func @transform_0(%arg0: i32, %arg1: i32) -> (i32, i32) {
    %c0_i32 = arith.constant 0 : i32
    %c0_i32_0 = arith.constant 0 : i32
    return %arg0, %c0_i32 : i32, i32
  }
  func.func @transform_1(%arg0: i32, %arg1: i32) -> (i32, i32) {
    %c0_i32 = arith.constant 0 : i32
    %c0_i32_0 = arith.constant 0 : i32
    return %c0_i32, %arg1 : i32, i32
  }
  func.func @transform_2(%arg0: i32, %arg1: i32) -> (i32, i32) {
    %c0_i32 = arith.constant 0 : i32
    %c0_i32_0 = arith.constant 0 : i32
    return %c0_i32, %arg1 : i32, i32
  }
  func.func @transform_3(%arg0: i32, %arg1: i32) -> (i32, i32) {
    %c0_i32 = arith.constant 0 : i32
    %c0_i32_0 = arith.constant 0 : i32
    return %c0_i32, %arg1 : i32, i32
  }
  func.func @transform_4(%arg0: i32, %arg1: i32) -> (i32, i32) {
    %c0_i32 = arith.constant 0 : i32
    return %arg0, %arg1 : i32, i32
  }
}

</mosaic_0001>

<llo_original>
// kernel: poly2_forward.1
$region0: #{poly2_forward.1}
  #allocation0 [shape = 'u32[]', space=smem, size = 0x4, offset = 0x4, fixed_abs, tag = 'smem constant byte address 0x4 - core index']
  #allocation1 [shape = 'u32[72,128]{1,0:T(1,128)}', space=vmem, size = 0x9000, scoped, tag = 'internal scratch']
  %s0 = inlined_call_operand.vmem [shape: f32[100,1], index: 0, kind: input, shape index: {}]
  %s1 = inlined_call_operand.vmem [shape: f32[1,128], index: 1, kind: input, shape index: {}]
  %s2 = inlined_call_operand.vmem [shape: f32[1,128], index: 2, kind: input, shape index: {}]
  %s3 = inlined_call_operand.vmem [shape: f32[1,128], index: 3, kind: input, shape index: {}]
  %s4 = inlined_call_operand.hbm [shape: f32[100,128], index: 4, kind: output, shape index: {}]
  %s5 = sld [smem:[#allocation0]]
  $region49: #{poly2_forward.1} parent=0
    _
  %s7 = ssub.s32 1, %s5
  %s8 = scalar_select 0, %s7, %s5
  $region1: #{poly2_forward.1} parent=0
    #allocation2 [shape = 'u8[57344]{0}', space=vmem, size = 0xe000, scoped, tag = 'output window, operand 0']
    #allocation3 [shape = 's32[2]{0}', space=sflag, size = 0x8, scoped, tag = 'scoped memory for poly2_forward.1']
    %9 = vsyncpa [#allocation3], 0
    %s10 = scalar_lea.sflag [#allocation3], 1
    %11 = vsyncpa %s10, 0
    loop: start=0, step=1, limit=4
    $region2: #{poly2_forward.1} parent=1 // loop_pre_header
      _
    $region3: #{poly2_forward.1} parent=1 // loop_header
      %s13 = sphi 0, %s17
      %p14 = scmp.ge.s32.totalorder %s13, 4
      %s20 = sphi 0, %s32
      %s21 = sphi 0, %s28
      %s22 = sphi 0, %s20
      %s23 = sphi 0, %s21
      %s24 = sphi 0, %s22
      %s25 = sphi 0, %s23
      %s35 = sphi 0, %s37
      %s38 = sphi 0, %s35
      %s39 = sphi 0, %s38
      %s55 = sphi 0, %s39
      %s61 = sphi 0, %s63
      %s64 = sphi 0, %s61
      %s65 = sphi 0, %s64
      %s81 = sphi 0, %s65
      %s87 = sphi 0, %s89
      %s90 = sphi 0, %s87
      %s91 = sphi 0, %s90
      %s107 = sphi 0, %s91
      %s113 = sphi 0, %s115
      %s116 = sphi 0, %s113
      %s117 = sphi 0, %s116
      %s133 = sphi 0, %s117
      %s141 = sphi 0, %s143
      %s144 = sphi 0, %s141
      %s145 = sphi 0, %s144
      %s161 = sphi 0, %s145
    $region4: #{poly2_forward.1} parent=1 // loop_header_branch
      %16 = sbr.rel (%p14) target = $region8
    $region5: #{poly2_forward.1} parent=1 // loop_body
      %s18 = ssub.s32 %s13, 1
      %s19 = ssub.s32 %s13, 2
      %s26 = sadd.s32 1, %s21
      %p27 = scmp.ge.s32.totalorder %s26, 1
      %s28 = scalar_select %p27, 0, %s26
      %s29 = sadd.s32 1, %s20
      %s30 = scalar_select %p27, %s29, %s20
      %p31 = scmp.ge.s32.totalorder %s30, 2
      %s32 = scalar_select %p31, 0, %s30
      %s33 = ssub.s32 %s20, %s32
      %p34 = scmp.eq.s32.totalorder %s33, 0
      %s36 = sadd.s32 %s35, 1
      %s37 = scalar_select %p34, %s35, %s36
      %p40 = pneg %p34
      %p41 = scmp.eq.s32.totalorder %s13, 1
      %p42 = por %p40, %p41
      %p43 = scmp.ne.s32.totalorder %s35, %s38
      %p44 = scmp.eq.s32.totalorder %s13, 0
      %p45 = por %p43, %p44
      %p46 = scmp.ne.s32.totalorder %s35, %s38
      %p47 = scmp.eq.s32.totalorder %s18, 1
      %p48 = por %p46, %p47
      %p49 = scmp.ne.s32.totalorder %s38, %s39
      %p50 = scmp.eq.s32.totalorder %s18, 0
      %p51 = por %p49, %p50
      %p52 = scmp.ne.s32.totalorder %s38, %s39
      %p53 = scmp.eq.s32.totalorder %s19, 1
      %p54 = por %p52, %p53
      %p56 = scmp.ne.s32.totalorder %s39, %s55
      %p57 = scmp.eq.s32.totalorder %s19, 0
      %p58 = por %p56, %p57
      %s59 = ssub.s32 %s21, %s28
      %p60 = scmp.eq.s32.totalorder %s59, 0
      %s62 = sadd.s32 %s61, 1
      %s63 = scalar_select %p60, %s61, %s62
      %p66 = pneg %p60
      %p67 = scmp.eq.s32.totalorder %s13, 1
      %p68 = por %p66, %p67
      %p69 = scmp.ne.s32.totalorder %s61, %s64
      %p70 = scmp.eq.s32.totalorder %s13, 0
      %p71 = por %p69, %p70
      %p72 = scmp.ne.s32.totalorder %s61, %s64
      %p73 = scmp.eq.s32.totalorder %s18, 1
      %p74 = por %p72, %p73
      %p75 = scmp.ne.s32.totalorder %s64, %s65
      %p76 = scmp.eq.s32.totalorder %s18, 0
      %p77 = por %p75, %p76
      %p78 = scmp.ne.s32.totalorder %s64, %s65
      %p79 = scmp.eq.s32.totalorder %s19, 1
      %p80 = por %p78, %p79
      %p82 = scmp.ne.s32.totalorder %s65, %s81
      %p83 = scmp.eq.s32.totalorder %s19, 0
      %p84 = por %p82, %p83
      %s85 = ssub.s32 %s21, %s28
      %p86 = scmp.eq.s32.totalorder %s85, 0
      %s88 = sadd.s32 %s87, 1
      %s89 = scalar_select %p86, %s87, %s88
      %p92 = pneg %p86
      %p93 = scmp.eq.s32.totalorder %s13, 1
      %p94 = por %p92, %p93
      %p95 = scmp.ne.s32.totalorder %s87, %s90
      %p96 = scmp.eq.s32.totalorder %s13, 0
      %p97 = por %p95, %p96
      %p98 = scmp.ne.s32.totalorder %s87, %s90
      %p99 = scmp.eq.s32.totalorder %s18, 1
      %p100 = por %p98, %p99
      %p101 = scmp.ne.s32.totalorder %s90, %s91
      %p102 = scmp.eq.s32.totalorder %s18, 0
      %p103 = por %p101, %p102
      %p104 = scmp.ne.s32.totalorder %s90, %s91
      %p105 = scmp.eq.s32.totalorder %s19, 1
      %p106 = por %p104, %p105
      %p108 = scmp.ne.s32.totalorder %s91, %s107
      %p109 = scmp.eq.s32.totalorder %s19, 0
      %p110 = por %p108, %p109
      %s111 = ssub.s32 %s21, %s28
      %p112 = scmp.eq.s32.totalorder %s111, 0
      %s114 = sadd.s32 %s113, 1
      %s115 = scalar_select %p112, %s113, %s114
      %p118 = pneg %p112
      %p119 = scmp.eq.s32.totalorder %s13, 1
      %p120 = por %p118, %p119
      %p121 = scmp.ne.s32.totalorder %s113, %s116
      %p122 = scmp.eq.s32.totalorder %s13, 0
      %p123 = por %p121, %p122
      %p124 = scmp.ne.s32.totalorder %s113, %s116
      %p125 = scmp.eq.s32.totalorder %s18, 1
      %p126 = por %p124, %p125
      %p127 = scmp.ne.s32.totalorder %s116, %s117
      %p128 = scmp.eq.s32.totalorder %s18, 0
      %p129 = por %p127, %p128
      %p130 = scmp.ne.s32.totalorder %s116, %s117
      %p131 = scmp.eq.s32.totalorder %s19, 1
      %p132 = por %p130, %p131
      %p134 = scmp.ne.s32.totalorder %s117, %s133
      %p135 = scmp.eq.s32.totalorder %s19, 0
      %p136 = por %p134, %p135
      %s137 = ssub.s32 %s20, %s32
      %s138 = ssub.s32 %s21, %s28
      %s139 = sor.u32 %s137, %s138
      %p140 = scmp.eq.s32.totalorder %s139, 0
      %s142 = sadd.s32 %s141, 1
      %s143 = scalar_select %p140, %s141, %s142
      %p146 = pneg %p140
      %p147 = scmp.eq.s32.totalorder %s13, 1
      %p148 = por %p146, %p147
      %p149 = scmp.ne.s32.totalorder %s141, %s144
      %p150 = scmp.eq.s32.totalorder %s13, 0
      %p151 = por %p149, %p150
      %p152 = scmp.ne.s32.totalorder %s141, %s144
      %p153 = scmp.eq.s32.totalorder %s18, 1
      %p154 = por %p152, %p153
      %p155 = scmp.ne.s32.totalorder %s144, %s145
      %p156 = scmp.eq.s32.totalorder %s18, 0
      %p157 = por %p155, %p156
      %p158 = scmp.ne.s32.totalorder %s144, %s145
      %p159 = scmp.eq.s32.totalorder %s19, 1
      %p160 = por %p158, %p159
      %p162 = scmp.ne.s32.totalorder %s145, %s161
      %p163 = scmp.eq.s32.totalorder %s19, 0
      %p164 = por %p162, %p163
      %p165 = scmp.le.s32.totalorder 1, %s13
      %p166 = scmp.lt.s32.totalorder %s13, 3
      %p167 = pnand %p165, %p166
      %p168 = pneg %p167
      // Predicated region
      $region9: #{poly2_forward.1} parent=5 // pred_check
        _
      $region10: #{poly2_forward.1} parent=5 // pred_check_branch
        %170 = sbr.rel (%p167) target = $region12
      $region11: #{poly2_forward.1} parent=5 // pred_region
        %s171 = ssub.s32 %s13, 1
        // Predicated region
        $region13: #{poly2_forward.1} parent=11 // pred_check
          %p172 = pneg %p77
        $region14: #{poly2_forward.1} parent=11 // pred_check_branch
          %174 = sbr.rel (%p172) target = $region16
        $region15: #{poly2_forward.1} parent=11 // pred_region
          %p175 = scmp.lt.s32.totalorder %s23, 0
          %s176 = scalar_select %p175, %s23, 0
          %s177 = scalar_lea.vmem %s1, %s176
        $region16: #{poly2_forward.1} parent=11 // pred_fallthru
          _
        // Predicated region
        $region17: #{poly2_forward.1} parent=11 // pred_check
          %p178 = pneg %p103
        $region18: #{poly2_forward.1} parent=11 // pred_check_branch
          %180 = sbr.rel (%p178) target = $region20
        $region19: #{poly2_forward.1} parent=11 // pred_region
          %p181 = scmp.lt.s32.totalorder %s23, 0
          %s182 = scalar_select %p181, %s23, 0
          %s183 = scalar_lea.vmem %s2, %s182
        $region20: #{poly2_forward.1} parent=11 // pred_fallthru
          _
        // Predicated region
        $region21: #{poly2_forward.1} parent=11 // pred_check
          %p184 = pneg %p129
        $region22: #{poly2_forward.1} parent=11 // pred_check_branch
          %186 = sbr.rel (%p184) target = $region24
        $region23: #{poly2_forward.1} parent=11 // pred_region
          %p187 = scmp.lt.s32.totalorder %s23, 0
          %s188 = scalar_select %p187, %s23, 0
          %s189 = scalar_lea.vmem %s3, %s188
        $region24: #{poly2_forward.1} parent=11 // pred_fallthru
          _
      $region12: #{poly2_forward.1} parent=5 // pred_fallthru
        _
      %p190 = scmp.lt.s32.totalorder %s13, 2
      // Predicated region
      $region25: #{poly2_forward.1} parent=5 // pred_check
        %p191 = pneg %p190
      $region26: #{poly2_forward.1} parent=5 // pred_check_branch
        %193 = sbr.rel (%p191) target = $region28
      $region27: #{poly2_forward.1} parent=5 // pred_region
        // Predicated region
        $region29: #{poly2_forward.1} parent=27 // pred_check
          %p194 = pneg %p45
        $region30: #{poly2_forward.1} parent=27 // pred_check_branch
          %196 = sbr.rel (%p194) target = $region32
        $region31: #{poly2_forward.1} parent=27 // pred_region
          %s197 = smul.u32 7, %s20
          %s198 = ssub.s32 13, %s197
          %p199 = scmp.lt.s32.totalorder %s198, 7
          %s200 = scalar_select %p199, %s198, 7
          %s201 = smul.u32 8, %s200
          %p202 = scmp.lt.s32.totalorder %s197, 12
          %s203 = scalar_select %p202, %s197, 12
          %s204 = smul.addr %s203, 8
          %s205 = scalar_lea.vmem %s0, %s204
          %s206 = smul.u32 7, %s20
          %s207 = ssub.s32 13, %s206
          %p208 = scmp.lt.s32.totalorder %s207, 7
          %s209 = scalar_select %p208, %s207, 7
          %s210 = smul.u32 8, %s209
        $region32: #{poly2_forward.1} parent=27 // pred_fallthru
          _
      $region28: #{poly2_forward.1} parent=5 // pred_fallthru
        _
      %p211 = scmp.le.s32.totalorder 1, %s13
      %p212 = scmp.lt.s32.totalorder %s13, 3
      %p213 = pnand %p211, %p212
      %p214 = pneg %p213
      // Predicated region
      $region33: #{poly2_forward.1} parent=5 // pred_check
        _
      $region34: #{poly2_forward.1} parent=5 // pred_check_branch
        %216 = sbr.rel (%p213) target = $region36
      $region35: #{poly2_forward.1} parent=5 // pred_region
        %s217 = ssub.s32 %s13, 1
        %s218 = smul.u32 7, %s22
        %s219 = ssub.s32 13, %s218
        %p220 = scmp.lt.s32.totalorder %s219, 7
        %s221 = scalar_select %p220, %s219, 7
        %s222 = smul.u32 8, %s221
        %p223 = scmp.lt.s32.totalorder %s218, 12
        %s224 = scalar_select %p223, %s218, 12
        %s225 = smul.addr %s224, 8
        %s226 = scalar_lea.vmem %s0, %s225
        %p227 = pneg %p51
        %p228 = pneg %p48
        %p229 = scmp.lt.s32.totalorder %s23, 0
        %s230 = scalar_select %p229, %s23, 0
        %s231 = scalar_lea.vmem %s1, %s230
        %p232 = pneg %p77
        %p233 = pneg %p74
        %p234 = scmp.lt.s32.totalorder %s23, 0
        %s235 = scalar_select %p234, %s23, 0
        %s236 = scalar_lea.vmem %s2, %s235
        %p237 = pneg %p103
        %p238 = pneg %p100
        %p239 = scmp.lt.s32.totalorder %s23, 0
        %s240 = scalar_select %p239, %s23, 0
        %s241 = scalar_lea.vmem %s3, %s240
        %p242 = pneg %p129
        %p243 = pneg %p126
        %p244 = pneg %p157
        %p245 = pneg %p154
        %s246 = sand.u32 %s144, 1
        %s247 = scalar_lea.sflag [#allocation3], %s246
        %s248 = sand.u32 %s144, 1
        %s249 = smul.addr %s248, 56
        %s250 = scalar_lea.vmem [#allocation2], %s249
        %s251 = smul.u32 7, %s22
        %s252 = ssub.s32 13, %s251
        %p253 = scmp.lt.s32.totalorder %s252, 7
        %s254 = scalar_select %p253, %s252, 7
        %s255 = smul.u32 8, %s254
        %p256 = scmp.lt.s32.totalorder %s251, 12
        %s257 = scalar_select %p256, %s251, 12
        %s258 = smul.addr %s257, 8
        %s259 = scalar_lea.vmem %s0, %s258
        %s260 = smul.u32 7, %s22
        %s261 = ssub.s32 13, %s260
        %p262 = scmp.lt.s32.totalorder %s261, 7
        %s263 = scalar_select %p262, %s261, 7
        %s264 = smul.u32 8, %s263
        %p265 = scmp.lt.s32.totalorder %s23, 0
        %s266 = scalar_select %p265, %s23, 0
        %s267 = scalar_lea.vmem %s1, %s266
        %p268 = scmp.lt.s32.totalorder %s23, 0
        %s269 = scalar_select %p268, %s23, 0
        %s270 = scalar_lea.vmem %s2, %s269
        %p271 = scmp.lt.s32.totalorder %s23, 0
        %s272 = scalar_select %p271, %s23, 0
        %s273 = scalar_lea.vmem %s3, %s272
        %s274 = smul.u32 7, %s22
        %s275 = ssub.s32 13, %s274
        %p276 = scmp.lt.s32.totalorder %s275, 7
        %s277 = scalar_select %p276, %s275, 7
        %s278 = smul.u32 8, %s277
        %v279 = vld [vmem:[%s259] sm:$0xff]
        %v280 = vld [vmem:[%s259 + $0x8] sm:$0xff]
        %v281 = vld [vmem:[%s259 + $0x10] sm:$0xff]
        %v282 = vld [vmem:[%s259 + $0x18] sm:$0xff]
        %v283 = vld [vmem:[%s259 + $0x20] sm:$0xff]
        %v284 = vld [vmem:[%s259 + $0x28] sm:$0xff]
        %v285 = vld [vmem:[%s259 + $0x30] sm:$0xff]
        %v286 = vld [vmem:[%s267] sm:$0x1]
        %v287 = vld [vmem:[%s270] sm:$0x1]
        %v288 = vsub.f32 %v287, %v286
        %v289 = vld [vmem:[%s273] sm:$0x1]
        %291 = vset.pattern.permute.xlu0 0
        %292 = vperm.xlu0 %291, %v279
        %v293 = vpop.permute.xlu0 %292
        %296 = vset.pattern.permute.xlu0 0
        %297 = vperm.xlu0 %296, %v280
        %v298 = vpop.permute.xlu0 %297
        %301 = vset.pattern.permute.xlu0 0
        %302 = vperm.xlu0 %301, %v281
        %v303 = vpop.permute.xlu0 %302
        %306 = vset.pattern.permute.xlu0 0
        %307 = vperm.xlu0 %306, %v282
        %v308 = vpop.permute.xlu0 %307
        %311 = vset.pattern.permute.xlu0 0
        %312 = vperm.xlu0 %311, %v283
        %v313 = vpop.permute.xlu0 %312
        %316 = vset.pattern.permute.xlu0 0
        %317 = vperm.xlu0 %316, %v284
        %v318 = vpop.permute.xlu0 %317
        %321 = vset.pattern.permute.xlu0 0
        %322 = vperm.xlu0 %321, %v285
        %v323 = vpop.permute.xlu0 %322
        %v326 = vperm.slane %v288, 0
        %v328 = vmul.f32 %v293, %v326
        %v329 = vmul.f32 %v298, %v326
        %v330 = vmul.f32 %v303, %v326
        %v331 = vmul.f32 %v308, %v326
        %v332 = vmul.f32 %v313, %v326
        %v333 = vmul.f32 %v318, %v326
        %v334 = vmul.f32 %v323, %v326
        %v336 = vperm.slane %v286, 0
        %v338 = vadd.f32 %v336, %v328
        %v339 = vadd.f32 %v336, %v329
        %v340 = vadd.f32 %v336, %v330
        %v341 = vadd.f32 %v336, %v331
        %v342 = vadd.f32 %v336, %v332
        %v343 = vadd.f32 %v336, %v333
        %v344 = vadd.f32 %v336, %v334
        %v345 = vmul.f32 %v279, %v279
        %v346 = vmul.f32 %v280, %v280
        %v347 = vmul.f32 %v281, %v281
        %v348 = vmul.f32 %v282, %v282
        %v349 = vmul.f32 %v283, %v283
        %v350 = vmul.f32 %v284, %v284
        %v351 = vmul.f32 %v285, %v285
        %v352 = vsub.f32 %v279, %v345
        %v353 = vsub.f32 %v280, %v346
        %v354 = vsub.f32 %v281, %v347
        %v355 = vsub.f32 %v282, %v348
        %v356 = vsub.f32 %v283, %v349
        %v357 = vsub.f32 %v284, %v350
        %v358 = vsub.f32 %v285, %v351
        %360 = vset.pattern.permute.xlu0 0
        %361 = vperm.xlu0 %360, %v352
        %v362 = vpop.permute.xlu0 %361
        %365 = vset.pattern.permute.xlu0 0
        %366 = vperm.xlu0 %365, %v353
        %v367 = vpop.permute.xlu0 %366
        %370 = vset.pattern.permute.xlu0 0
        %371 = vperm.xlu0 %370, %v354
        %v372 = vpop.permute.xlu0 %371
        %375 = vset.pattern.permute.xlu0 0
        %376 = vperm.xlu0 %375, %v355
        %v377 = vpop.permute.xlu0 %376
        %380 = vset.pattern.permute.xlu0 0
        %381 = vperm.xlu0 %380, %v356
        %v382 = vpop.permute.xlu0 %381
        %385 = vset.pattern.permute.xlu0 0
        %386 = vperm.xlu0 %385, %v357
        %v387 = vpop.permute.xlu0 %386
        %390 = vset.pattern.permute.xlu0 0
        %391 = vperm.xlu0 %390, %v358
        %v392 = vpop.permute.xlu0 %391
        %v395 = vperm.slane %v289, 0
        %v397 = vmul.f32 %v362, %v395
        %v398 = vmul.f32 %v367, %v395
        %v399 = vmul.f32 %v372, %v395
        %v400 = vmul.f32 %v377, %v395
        %v401 = vmul.f32 %v382, %v395
        %v402 = vmul.f32 %v387, %v395
        %v403 = vmul.f32 %v392, %v395
        %v404 = vadd.f32 %v338, %v397
        %v405 = vadd.f32 %v339, %v398
        %v406 = vadd.f32 %v340, %v399
        %v407 = vadd.f32 %v341, %v400
        %v408 = vadd.f32 %v342, %v401
        %v409 = vadd.f32 %v343, %v402
        %v410 = vadd.f32 %v344, %v403
        %411 = vst [vmem:[%s250] sm:$0xff] %v404
        %412 = vst [vmem:[%s250 + $0x8] sm:$0xff] %v405
        %413 = vst [vmem:[%s250 + $0x10] sm:$0xff] %v406
        %414 = vst [vmem:[%s250 + $0x18] sm:$0xff] %v407
        %415 = vst [vmem:[%s250 + $0x20] sm:$0xff] %v408
        %416 = vst [vmem:[%s250 + $0x28] sm:$0xff] %v409
        %417 = vst [vmem:[%s250 + $0x30] sm:$0xff] %v410
        %s418 = sand.u32 %s144, 1
        %s419 = scalar_lea.sflag [#allocation3], %s418
        %s420 = sand.u32 %s144, 1
        %s421 = smul.addr %s420, 56
        %s422 = scalar_lea.vmem [#allocation2], %s421
        // Predicated region
        $region37: #{poly2_forward.1} parent=35 // pred_check
          %p423 = pneg %p154
        $region38: #{poly2_forward.1} parent=35 // pred_check_branch
          %425 = sbr.rel (%p423) target = $region40
        $region39: #{poly2_forward.1} parent=35 // pred_region
          %s426 = smul.u32 7, %s22
          %s427 = ssub.s32 13, %s426
          %p428 = scmp.lt.s32.totalorder %s427, 7
          %s429 = scalar_select %p428, %s427, 7
          %s430 = smul.u32 8, %s429
          %s431 = ssub.s32 56, %s430
          %s432 = sshll.u32 %s431, 4
          %433 = vsyncadd %s419, %s432
          %p434 = scmp.ne.s32.totalorder 0, %s430
          %s435 = sadd.s32 %s23, %s426
          %s436 = smul.addr %s435, 8
          %s437 = scalar_lea.hbm %s4, %s436
          %s438 = smul.u32 8, %s429
          %s439 = sshll.u32 %s422, 4
          %s440 = int_to_ptr.vmem [resolvable:$true] %s439
          %s441 = sshll.u32 %s437, 4
          %s442 = int_to_ptr.hbm [resolvable:$true] %s441
          %s443 = sshll.u32 %s438, 4
          %447 = dma.vmem_to_hbm [thread:$0]  (%p434), %s440, %s443, %s442, %s419, 128, 128, 8
        $region40: #{poly2_forward.1} parent=35 // pred_fallthru
          _
      $region36: #{poly2_forward.1} parent=5 // pred_fallthru
        _
      %p448 = scmp.le.s32.totalorder 2, %s13
      // Predicated region
      $region41: #{poly2_forward.1} parent=5 // pred_check
        %p449 = pneg %p448
      $region42: #{poly2_forward.1} parent=5 // pred_check_branch
        %451 = sbr.rel (%p449) target = $region44
      $region43: #{poly2_forward.1} parent=5 // pred_region
        %s452 = ssub.s32 %s13, 2
        // Predicated region
        $region45: #{poly2_forward.1} parent=43 // pred_check
          %p453 = pneg %p160
        $region46: #{poly2_forward.1} parent=43 // pred_check_branch
          %455 = sbr.rel (%p453) target = $region48
        $region47: #{poly2_forward.1} parent=43 // pred_region
          %s456 = sand.u32 %s145, 1
          %s457 = scalar_lea.sflag [#allocation3], %s456
          %s458 = sand.u32 %s145, 1
          %s459 = smul.addr %s458, 56
          %s460 = scalar_lea.vmem [#allocation2], %s459
          %462 = dma.done %s457, 896
        $region48: #{poly2_forward.1} parent=43 // pred_fallthru
          _
      $region44: #{poly2_forward.1} parent=5 // pred_fallthru
        _
    $region6: #{poly2_forward.1} parent=1 // loop_footer
      %s17 = sadd.s32 1, %s13
    $region7: #{poly2_forward.1} parent=1 // loop_footer_branch
      %12 = sbr.rel target = $region3
    $region8: #{poly2_forward.1} parent=1 // loop_exit
      _
    %463 = vsyncpa [#allocation3], 1
    %s464 = scalar_lea.sflag [#allocation3], 1
    %465 = vsyncpa %s464, 1

</llo_original>
